<compile_context>
chip_gen: v5e
topology: v5e:2x2
jax: 0.10.0
libtpu: 0.0.40
codegen_flags: <defaults>
</compile_context>

<pallas_src>
import functools

import jax
import jax.numpy as jnp
import numpy as np
from jax.experimental import pallas as pl
from jax.experimental.pallas import tpu as pltpu


def _dice_partials_kernel(logits_ref, targets_ref, inter_out, union_out,
                          *, num_classes, tile_rows, t_inner, hw_valid,
                          mask_needed):
    so = pl.program_id(1)
    t = pl.program_id(2)

    # Output blocks are VMEM-resident across the inner (reduction) axis and act
    # as the accumulators: zero them on the first spatial step of each (n, so).
    @pl.when(t == 0)
    def _():
        inter_out[...] = jnp.zeros_like(inter_out)
        union_out[...] = jnp.zeros_like(union_out)

    # ---- softmax over classes, fully lane- and sublane-dense ---------------
    # Each class slab is (tile_rows, 128): spatial fills sublanes AND lanes, so
    # the class reduction is a chain of elementwise ops over full vregs.
    xs = [logits_ref[c].astype(jnp.float32) for c in range(num_classes)]
    m = xs[0]
    for c in range(1, num_classes):
        m = jnp.maximum(m, xs[c])
    es = [jnp.exp(x - m) for x in xs]
    s = es[0]
    for c in range(1, num_classes):
        s = s + es[c]
    r = pl.reciprocal(s, approx=True)        # EUP slot (free-ish)
    r = r * (2.0 - s * r)                    # one Newton step -> ~f32 accurate
    ps = [e * r for e in es]                 # per-class probs, (tile_rows, 128)

    tgt = targets_ref[...]                   # (tile_rows, 128) int32
    n_groups = tile_rows // 8                # tile_rows is always a multiple of 8

    def fold8(v):
        # (tile_rows, 128) -> (8, 128): unrolled elementwise adds over static
        # 8-sublane slices (no reshape, no XLU).
        out = v[0:8]
        for g in range(1, n_groups):
            out = out + v[g * 8:(g + 1) * 8]
        return out

    def accumulate(union_ps):
        for c in range(num_classes):
            hit = tgt == c                   # padded targets hold class C -> False
            hit_f = hit.astype(jnp.float32)
            inter_out[c] += fold8(jnp.where(hit, ps[c], 0.0))
            union_out[c] += fold8(union_ps[c] + hit_f)

    if mask_needed:
        # Only tiles whose spatial range crosses hw_valid contain padded columns;
        # all other steps take the dense (mask-free) path.
        gt = so * t_inner + t
        tile_base = gt * (tile_rows * 128)
        tile_end = tile_base + tile_rows * 128

        @pl.when(tile_end <= hw_valid)
        def _():
            accumulate(ps)

        @pl.when(tile_end > hw_valid)
        def _():
            pos = (tile_base
                   + jax.lax.broadcasted_iota(jnp.int32, (tile_rows, 128), 0) * 128
                   + jax.lax.broadcasted_iota(jnp.int32, (tile_rows, 128), 1))
            valid = pos < hw_valid
            # selects (not multiplies) so padded-column probs cannot leak
            accumulate([jnp.where(valid, p, 0.0) for p in ps])
    else:
        accumulate(ps)


def dice_loss_pallas(logits, targets, weight=None, smooth=1e-6,
                     target_block_bytes=4 * 1024 * 1024):
    """logits: (N, C, H, W) float, targets: (N, H, W) int -> scalar dice loss."""
    N, C, H, W = logits.shape
    HW = H * W
    itemsize = jnp.dtype(logits.dtype).itemsize

    # Spatial tiling: view the spatial extent as rows of 128 lanes; blocks are
    # (C, tile_rows, 128) with tile_rows a multiple of 8, sized to ~4 MiB of logits.
    rows = pl.cdiv(HW, 128)
    rows8 = pl.cdiv(rows, 8) * 8
    cand = max(8, (target_block_bytes // (C * 128 * itemsize)) // 8 * 8)
    tile_rows = min(cand, rows8)
    num_t = pl.cdiv(rows8, tile_rows)
    tile_rows = pl.cdiv(rows8, 8 * num_t) * 8    # rebalance -> bounded tail padding

    # Second "parallel" grid axis over spatial chunks: keeps both v7x TensorCores
    # busy when N == 1 (harmless size-1 axis otherwise; v5e/v6e have a single TC).
    s_outer = 2 if (N == 1 and num_t >= 2) else 1
    t_inner = pl.cdiv(num_t, s_outer)
    num_t = s_outer * t_inner
    rows_pad = num_t * tile_rows
    HW_pad = rows_pad * 128
    mask_needed = HW_pad != HW

    # Free (contiguous) views in the common case; padding only for awkward shapes.
    logits3 = logits.reshape(N, C, HW)
    targets2 = targets.reshape(N, HW).astype(jnp.int32)
    if mask_needed:
        # TODO(synk): for HW not a multiple of the tile this materializes a padded
        # copy of the logits in HBM; a tail-tile path streaming unpadded logits
        # would avoid that extra traffic for very ragged spatial extents.
        logits3 = jnp.pad(logits3, ((0, 0), (0, 0), (0, HW_pad - HW)))
        # pad targets with an out-of-range class so one-hot is all-zero there
        targets2 = jnp.pad(targets2, ((0, 0), (0, HW_pad - HW)), constant_values=C)
    logits4 = logits3.reshape(N, C, rows_pad, 128)
    targets3 = targets2.reshape(N, rows_pad, 128)

    kernel = functools.partial(
        _dice_partials_kernel, num_classes=C, tile_rows=tile_rows,
        t_inner=t_inner, hw_valid=HW, mask_needed=mask_needed)

    out_shape = tuple(jax.ShapeDtypeStruct((N, s_outer, C, 8, 128), jnp.float32)
                      for _ in range(2))
    out_spec = pl.BlockSpec((pl.Squeezed(), pl.Squeezed(), C, 8, 128),
                            lambda n, so, t: (n, so, 0, 0, 0))

    inter_p, union_p = pl.pallas_call(
        kernel,
        out_shape=out_shape,
        grid_spec=pltpu.PrefetchScalarGridSpec(
            num_scalar_prefetch=0,
            grid=(N, s_outer, t_inner),
            in_specs=[
                # logits block: (C, tile_rows, 128) -- spatial on sublanes+lanes
                pl.BlockSpec((pl.Squeezed(), C, tile_rows, 128),
                             lambda n, so, t: (n, 0, so * t_inner + t, 0)),
                # targets block: (tile_rows, 128)
                pl.BlockSpec((pl.Squeezed(), tile_rows, 128),
                             lambda n, so, t: (n, so * t_inner + t, 0)),
            ],
            out_specs=[out_spec, out_spec],
        ),
        compiler_params=pltpu.CompilerParams(
            dimension_semantics=("parallel", "parallel", "arbitrary"),
            vmem_limit_bytes=48 * 1024 * 1024,   # safe on v7x (64 MiB), ample v5e/v6e
        ),
    )(logits4, targets3)

    # Tiny finalize in plain JAX: combine partials, compute dice + mean.
    inter = jnp.sum(inter_p, axis=(0, 1, 3, 4))      # (C,)
    union = jnp.sum(union_p, axis=(0, 1, 3, 4))      # (C,)
    dice = (2.0 * inter + smooth) / (union + smooth)
    dice_loss = 1.0 - dice
    if weight is not None:
        # matches PyTorch: plain mean of (weight * per-class dice loss)
        return jnp.mean(weight * dice_loss)
    return jnp.mean(dice_loss)


def dice_loss_ref(logits, targets, smooth=1e-6):
    """Pure-JAX reference mirroring the PyTorch forward."""
    probs = jax.nn.softmax(logits, axis=1)                         # (N, C, H, W)
    C = logits.shape[1]
    onehot = jax.nn.one_hot(targets, C, dtype=jnp.float32)         # (N, H, W, C)
    onehot = jnp.transpose(onehot, (0, 3, 1, 2))                   # (N, C, H, W)
    dims = (0, 2, 3)
    inter = jnp.sum(probs * onehot, axis=dims)
    union = jnp.sum(probs, axis=dims) + jnp.sum(onehot, axis=dims)
    dice = (2.0 * inter + smooth) / (union + smooth)
    return jnp.mean(1.0 - dice)


if __name__ == "__main__":
    key = jax.random.PRNGKey(0)
    k1, k2 = jax.random.split(key)

    N, C, H, W = 2, 4, 16, 16
    logits = jax.random.normal(k1, (N, C, H, W), dtype=jnp.float32)
    targets = jax.random.randint(k2, (N, H, W), 0, C, dtype=jnp.int32)

    loss = dice_loss_pallas(logits, targets)
    jax.block_until_ready(loss)

    ref = dice_loss_ref(logits, targets)
    np.testing.assert_allclose(np.asarray(loss), np.asarray(ref), rtol=1e-5, atol=1e-6)

    print("KERNEL_OK")
</pallas_src>

<mosaic_0001>
module attributes {stable_mosaic.version = 11 : i64} {
  func.func @_dice_partials_kernel(%arg0: i32, %arg1: i32, %arg2: i32, %arg3: memref<1x4x8x128xf32, #tpu.memory_space<vmem>>, %arg4: memref<1x8x128xi32, #tpu.memory_space<vmem>>, %arg5: memref<1x1x4x8x128xf32, #tpu.memory_space<vmem>>, %arg6: memref<1x1x4x8x128xf32, #tpu.memory_space<vmem>>) attributes {dimension_semantics = [#tpu.dimension_semantics<parallel>, #tpu.dimension_semantics<parallel>, #tpu.dimension_semantics<arbitrary>], iteration_bounds = array<i64: 2, 1, 1>, scalar_prefetch = 0 : i64, scratch_operands = 0 : i64, tpu.core_type = #tpu.core_type<tc>, window_params = [{transform_indices = @transform_0, window_bounds = array<i64: 1, 4, 8, 128>}, {transform_indices = @transform_1, window_bounds = array<i64: 1, 8, 128>}, {transform_indices = @transform_2, window_bounds = array<i64: 1, 1, 4, 8, 128>}, {transform_indices = @transform_3, window_bounds = array<i64: 1, 1, 4, 8, 128>}]} {
    %c0_i32 = arith.constant 0 : i32
    %0 = arith.cmpi eq, %arg2, %c0_i32 : i32
    %1 = arith.extui %0 : i1 to i32
    %c0_i32_0 = arith.constant 0 : i32
    %2 = arith.cmpi ne, %1, %c0_i32_0 : i32
    scf.if %2 {
      %cst_20 = arith.constant 0.000000e+00 : f32
      %46 = vector.broadcast %cst_20 : f32 to vector<4x8x128xf32>
      %c0_21 = arith.constant 0 : index
      %c0_22 = arith.constant 0 : index
      %c0_23 = arith.constant 0 : index
      %c0_24 = arith.constant 0 : index
      %c0_25 = arith.constant 0 : index
      %47 = vector.load %arg5[%c0_21, %c0_22, %c0_23, %c0_24, %c0_25] : memref<1x1x4x8x128xf32, #tpu.memory_space<vmem>>, vector<1x1x4x8x128xf32>
      %48 = vector.shape_cast %47 : vector<1x1x4x8x128xf32> to vector<4x8x128xf32>
      %49 = vector.shape_cast %46 : vector<4x8x128xf32> to vector<1x1x4x8x128xf32>
      tpu.vector_store %arg5[%c0_21, %c0_22, %c0_23, %c0_24, %c0_25], %49 {strides = array<i32>} : memref<1x1x4x8x128xf32, #tpu.memory_space<vmem>>, vector<1x1x4x8x128xf32>,
      %cst_26 = arith.constant 0.000000e+00 : f32
      %50 = vector.broadcast %cst_26 : f32 to vector<4x8x128xf32>
      %c0_27 = arith.constant 0 : index
      %c0_28 = arith.constant 0 : index
      %c0_29 = arith.constant 0 : index
      %c0_30 = arith.constant 0 : index
      %c0_31 = arith.constant 0 : index
      %51 = vector.load %arg6[%c0_27, %c0_28, %c0_29, %c0_30, %c0_31] : memref<1x1x4x8x128xf32, #tpu.memory_space<vmem>>, vector<1x1x4x8x128xf32>
      %52 = vector.shape_cast %51 : vector<1x1x4x8x128xf32> to vector<4x8x128xf32>
      %53 = vector.shape_cast %50 : vector<4x8x128xf32> to vector<1x1x4x8x128xf32>
      tpu.vector_store %arg6[%c0_27, %c0_28, %c0_29, %c0_30, %c0_31], %53 {strides = array<i32>} : memref<1x1x4x8x128xf32, #tpu.memory_space<vmem>>, vector<1x1x4x8x128xf32>,
    } else {
    }
    %c0 = arith.constant 0 : index
    %c0_1 = arith.constant 0 : index
    %c0_2 = arith.constant 0 : index
    %c0_3 = arith.constant 0 : index
    %3 = vector.load %arg3[%c0, %c0_1, %c0_2, %c0_3] : memref<1x4x8x128xf32, #tpu.memory_space<vmem>>, vector<1x1x8x128xf32>
    %4 = vector.shape_cast %3 : vector<1x1x8x128xf32> to vector<8x128xf32>
    %c0_4 = arith.constant 0 : index
    %c1 = arith.constant 1 : index
    %c0_5 = arith.constant 0 : index
    %c0_6 = arith.constant 0 : index
    %5 = vector.load %arg3[%c0_4, %c1, %c0_5, %c0_6] : memref<1x4x8x128xf32, #tpu.memory_space<vmem>>, vector<1x1x8x128xf32>
    %6 = vector.shape_cast %5 : vector<1x1x8x128xf32> to vector<8x128xf32>
    %c0_7 = arith.constant 0 : index
    %c2 = arith.constant 2 : index
    %c0_8 = arith.constant 0 : index
    %c0_9 = arith.constant 0 : index
    %7 = vector.load %arg3[%c0_7, %c2, %c0_8, %c0_9] : memref<1x4x8x128xf32, #tpu.memory_space<vmem>>, vector<1x1x8x128xf32>
    %8 = vector.shape_cast %7 : vector<1x1x8x128xf32> to vector<8x128xf32>
    %c0_10 = arith.constant 0 : index
    %c3 = arith.constant 3 : index
    %c0_11 = arith.constant 0 : index
    %c0_12 = arith.constant 0 : index
    %9 = vector.load %arg3[%c0_10, %c3, %c0_11, %c0_12] : memref<1x4x8x128xf32, #tpu.memory_space<vmem>>, vector<1x1x8x128xf32>
    %10 = vector.shape_cast %9 : vector<1x1x8x128xf32> to vector<8x128xf32>
    %11 = arith.maximumf %4, %6 : vector<8x128xf32>
    %12 = arith.maximumf %11, %8 : vector<8x128xf32>
    %13 = arith.maximumf %12, %10 : vector<8x128xf32>
    %14 = arith.subf %4, %13 : vector<8x128xf32>
    %15 = math.exp %14 : vector<8x128xf32>
    %16 = arith.subf %6, %13 : vector<8x128xf32>
    %17 = math.exp %16 : vector<8x128xf32>
    %18 = arith.subf %8, %13 : vector<8x128xf32>
    %19 = math.exp %18 : vector<8x128xf32>
    %20 = arith.subf %10, %13 : vector<8x128xf32>
    %21 = math.exp %20 : vector<8x128xf32>
    %22 = arith.addf %15, %17 : vector<8x128xf32>
    %23 = arith.addf %22, %19 : vector<8x128xf32>
    %24 = arith.addf %23, %21 : vector<8x128xf32>
    %25 = tpu.reciprocal %24 {approx = true} : vector<8x128xf32> -> vector<8x128xf32>
    %26 = arith.mulf %24, %25 : vector<8x128xf32>
    %cst = arith.constant 2.000000e+00 : f32
    %27 = vector.broadcast %cst : f32 to vector<8x128xf32>
    %28 = arith.subf %27, %26 : vector<8x128xf32>
    %29 = arith.mulf %25, %28 : vector<8x128xf32>
    %30 = arith.mulf %15, %29 : vector<8x128xf32>
    %31 = arith.mulf %17, %29 : vector<8x128xf32>
    %32 = arith.mulf %19, %29 : vector<8x128xf32>
    %33 = arith.mulf %21, %29 : vector<8x128xf32>
    %c0_13 = arith.constant 0 : index
    %c0_14 = arith.constant 0 : index
    %c0_15 = arith.constant 0 : index
    %34 = vector.load %arg4[%c0_13, %c0_14, %c0_15] : memref<1x8x128xi32, #tpu.memory_space<vmem>>, vector<1x8x128xi32>
    %35 = vector.shape_cast %34 : vector<1x8x128xi32> to vector<8x128xi32>
    %c1_i32 = arith.constant 1 : i32
    %36 = arith.muli %arg1, %c1_i32 : i32
    %37 = arith.addi %36, %arg2 : i32
    %c1024_i32 = arith.constant 1024 : i32
    %38 = arith.muli %37, %c1024_i32 : i32
    %c1024_i32_16 = arith.constant 1024 : i32
    %39 = arith.addi %38, %c1024_i32_16 : i32
    %c256_i32 = arith.constant 256 : i32
    %40 = arith.cmpi sle, %39, %c256_i32 : i32
    %41 = arith.extui %40 : i1 to i32
    %c0_i32_17 = arith.constant 0 : i32
    %42 = arith.cmpi ne, %41, %c0_i32_17 : i32
    scf.if %42 {
      %c0_i32_20 = arith.constant 0 : i32
      %46 = vector.broadcast %c0_i32_20 : i32 to vector<8x128xi32>
      %47 = arith.cmpi eq, %35, %46 : vector<8x128xi32>
      %48 = arith.extui %47 : vector<8x128xi1> to vector<8x128xi32>
      %49 = arith.sitofp %48 : vector<8x128xi32> to vector<8x128xf32>
      %c0_21 = arith.constant 0 : index
      %c0_22 = arith.constant 0 : index
      %c0_23 = arith.constant 0 : index
      %c0_24 = arith.constant 0 : index
      %c0_25 = arith.constant 0 : index
      %50 = vector.load %arg5[%c0_21, %c0_22, %c0_23, %c0_24, %c0_25] : memref<1x1x4x8x128xf32, #tpu.memory_space<vmem>>, vector<1x1x1x8x128xf32>
      %51 = vector.shape_cast %50 : vector<1x1x1x8x128xf32> to vector<8x128xf32>
      %cst_26 = arith.constant 0.000000e+00 : f32
      %52 = vector.broadcast %cst_26 : f32 to vector<8x128xf32>
      %53 = arith.select %47, %30, %52 : vector<8x128xi1>, vector<8x128xf32>
      %54 = arith.addf %51, %53 : vector<8x128xf32>
      %c0_27 = arith.constant 0 : index
      %c0_28 = arith.constant 0 : index
      %c0_29 = arith.constant 0 : index
      %c0_30 = arith.constant 0 : index
      %c0_31 = arith.constant 0 : index
      %55 = vector.load %arg5[%c0_27, %c0_28, %c0_29, %c0_30, %c0_31] : memref<1x1x4x8x128xf32, #tpu.memory_space<vmem>>, vector<1x1x1x8x128xf32>
      %56 = vector.shape_cast %55 : vector<1x1x1x8x128xf32> to vector<8x128xf32>
      %57 = vector.shape_cast %54 : vector<8x128xf32> to vector<1x1x1x8x128xf32>
      tpu.vector_store %arg5[%c0_27, %c0_28, %c0_29, %c0_30, %c0_31], %57 {strides = array<i32>} : memref<1x1x4x8x128xf32, #tpu.memory_space<vmem>>, vector<1x1x1x8x128xf32>,
      %c0_32 = arith.constant 0 : index
      %c0_33 = arith.constant 0 : index
      %c0_34 = arith.constant 0 : index
      %c0_35 = arith.constant 0 : index
      %c0_36 = arith.constant 0 : index
      %58 = vector.load %arg6[%c0_32, %c0_33, %c0_34, %c0_35, %c0_36] : memref<1x1x4x8x128xf32, #tpu.memory_space<vmem>>, vector<1x1x1x8x128xf32>
      %59 = vector.shape_cast %58 : vector<1x1x1x8x128xf32> to vector<8x128xf32>
      %60 = arith.addf %30, %49 : vector<8x128xf32>
      %61 = arith.addf %59, %60 : vector<8x128xf32>
      %c0_37 = arith.constant 0 : index
      %c0_38 = arith.constant 0 : index
      %c0_39 = arith.constant 0 : index
      %c0_40 = arith.constant 0 : index
      %c0_41 = arith.constant 0 : index
      %62 = vector.load %arg6[%c0_37, %c0_38, %c0_39, %c0_40, %c0_41] : memref<1x1x4x8x128xf32, #tpu.memory_space<vmem>>, vector<1x1x1x8x128xf32>
      %63 = vector.shape_cast %62 : vector<1x1x1x8x128xf32> to vector<8x128xf32>
      %64 = vector.shape_cast %61 : vector<8x128xf32> to vector<1x1x1x8x128xf32>
      tpu.vector_store %arg6[%c0_37, %c0_38, %c0_39, %c0_40, %c0_41], %64 {strides = array<i32>} : memref<1x1x4x8x128xf32, #tpu.memory_space<vmem>>, vector<1x1x1x8x128xf32>,
      %c1_i32_42 = arith.constant 1 : i32
      %65 = vector.broadcast %c1_i32_42 : i32 to vector<8x128xi32>
      %66 = arith.cmpi eq, %35, %65 : vector<8x128xi32>
      %67 = arith.extui %66 : vector<8x128xi1> to vector<8x128xi32>
      %68 = arith.sitofp %67 : vector<8x128xi32> to vector<8x128xf32>
      %c0_43 = arith.constant 0 : index
      %c0_44 = arith.constant 0 : index
      %c1_45 = arith.constant 1 : index
      %c0_46 = arith.constant 0 : index
      %c0_47 = arith.constant 0 : index
      %69 = vector.load %arg5[%c0_43, %c0_44, %c1_45, %c0_46, %c0_47] : memref<1x1x4x8x128xf32, #tpu.memory_space<vmem>>, vector<1x1x1x8x128xf32>
      %70 = vector.shape_cast %69 : vector<1x1x1x8x128xf32> to vector<8x128xf32>
      %cst_48 = arith.constant 0.000000e+00 : f32
      %71 = vector.broadcast %cst_48 : f32 to vector<8x128xf32>
      %72 = arith.select %66, %31, %71 : vector<8x128xi1>, vector<8x128xf32>
      %73 = arith.addf %70, %72 : vector<8x128xf32>
      %c0_49 = arith.constant 0 : index
      %c0_50 = arith.constant 0 : index
      %c1_51 = arith.constant 1 : index
      %c0_52 = arith.constant 0 : index
      %c0_53 = arith.constant 0 : index
      %74 = vector.load %arg5[%c0_49, %c0_50, %c1_51, %c0_52, %c0_53] : memref<1x1x4x8x128xf32, #tpu.memory_space<vmem>>, vector<1x1x1x8x128xf32>
      %75 = vector.shape_cast %74 : vector<1x1x1x8x128xf32> to vector<8x128xf32>
      %76 = vector.shape_cast %73 : vector<8x128xf32> to vector<1x1x1x8x128xf32>
      tpu.vector_store %arg5[%c0_49, %c0_50, %c1_51, %c0_52, %c0_53], %76 {strides = array<i32>} : memref<1x1x4x8x128xf32, #tpu.memory_space<vmem>>, vector<1x1x1x8x128xf32>,
      %c0_54 = arith.constant 0 : index
      %c0_55 = arith.constant 0 : index
      %c1_56 = arith.constant 1 : index
      %c0_57 = arith.constant 0 : index
      %c0_58 = arith.constant 0 : index
      %77 = vector.load %arg6[%c0_54, %c0_55, %c1_56, %c0_57, %c0_58] : memref<1x1x4x8x128xf32, #tpu.memory_space<vmem>>, vector<1x1x1x8x128xf32>
      %78 = vector.shape_cast %77 : vector<1x1x1x8x128xf32> to vector<8x128xf32>
      %79 = arith.addf %31, %68 : vector<8x128xf32>
      %80 = arith.addf %78, %79 : vector<8x128xf32>
      %c0_59 = arith.constant 0 : index
      %c0_60 = arith.constant 0 : index
      %c1_61 = arith.constant 1 : index
      %c0_62 = arith.constant 0 : index
      %c0_63 = arith.constant 0 : index
      %81 = vector.load %arg6[%c0_59, %c0_60, %c1_61, %c0_62, %c0_63] : memref<1x1x4x8x128xf32, #tpu.memory_space<vmem>>, vector<1x1x1x8x128xf32>
      %82 = vector.shape_cast %81 : vector<1x1x1x8x128xf32> to vector<8x128xf32>
      %83 = vector.shape_cast %80 : vector<8x128xf32> to vector<1x1x1x8x128xf32>
      tpu.vector_store %arg6[%c0_59, %c0_60, %c1_61, %c0_62, %c0_63], %83 {strides = array<i32>} : memref<1x1x4x8x128xf32, #tpu.memory_space<vmem>>, vector<1x1x1x8x128xf32>,
      %c2_i32 = arith.constant 2 : i32
      %84 = vector.broadcast %c2_i32 : i32 to vector<8x128xi32>
      %85 = arith.cmpi eq, %35, %84 : vector<8x128xi32>
      %86 = arith.extui %85 : vector<8x128xi1> to vector<8x128xi32>
      %87 = arith.sitofp %86 : vector<8x128xi32> to vector<8x128xf32>
      %c0_64 = arith.constant 0 : index
      %c0_65 = arith.constant 0 : index
      %c2_66 = arith.constant 2 : index
      %c0_67 = arith.constant 0 : index
      %c0_68 = arith.constant 0 : index
      %88 = vector.load %arg5[%c0_64, %c0_65, %c2_66, %c0_67, %c0_68] : memref<1x1x4x8x128xf32, #tpu.memory_space<vmem>>, vector<1x1x1x8x128xf32>
      %89 = vector.shape_cast %88 : vector<1x1x1x8x128xf32> to vector<8x128xf32>
      %cst_69 = arith.constant 0.000000e+00 : f32
      %90 = vector.broadcast %cst_69 : f32 to vector<8x128xf32>
      %91 = arith.select %85, %32, %90 : vector<8x128xi1>, vector<8x128xf32>
      %92 = arith.addf %89, %91 : vector<8x128xf32>
      %c0_70 = arith.constant 0 : index
      %c0_71 = arith.constant 0 : index
      %c2_72 = arith.constant 2 : index
      %c0_73 = arith.constant 0 : index
      %c0_74 = arith.constant 0 : index
      %93 = vector.load %arg5[%c0_70, %c0_71, %c2_72, %c0_73, %c0_74] : memref<1x1x4x8x128xf32, #tpu.memory_space<vmem>>, vector<1x1x1x8x128xf32>
      %94 = vector.shape_cast %93 : vector<1x1x1x8x128xf32> to vector<8x128xf32>
      %95 = vector.shape_cast %92 : vector<8x128xf32> to vector<1x1x1x8x128xf32>
      tpu.vector_store %arg5[%c0_70, %c0_71, %c2_72, %c0_73, %c0_74], %95 {strides = array<i32>} : memref<1x1x4x8x128xf32, #tpu.memory_space<vmem>>, vector<1x1x1x8x128xf32>,
      %c0_75 = arith.constant 0 : index
      %c0_76 = arith.constant 0 : index
      %c2_77 = arith.constant 2 : index
      %c0_78 = arith.constant 0 : index
      %c0_79 = arith.constant 0 : index
      %96 = vector.load %arg6[%c0_75, %c0_76, %c2_77, %c0_78, %c0_79] : memref<1x1x4x8x128xf32, #tpu.memory_space<vmem>>, vector<1x1x1x8x128xf32>
      %97 = vector.shape_cast %96 : vector<1x1x1x8x128xf32> to vector<8x128xf32>
      %98 = arith.addf %32, %87 : vector<8x128xf32>
      %99 = arith.addf %97, %98 : vector<8x128xf32>
      %c0_80 = arith.constant 0 : index
      %c0_81 = arith.constant 0 : index
      %c2_82 = arith.constant 2 : index
      %c0_83 = arith.constant 0 : index
      %c0_84 = arith.constant 0 : index
      %100 = vector.load %arg6[%c0_80, %c0_81, %c2_82, %c0_83, %c0_84] : memref<1x1x4x8x128xf32, #tpu.memory_space<vmem>>, vector<1x1x1x8x128xf32>
      %101 = vector.shape_cast %100 : vector<1x1x1x8x128xf32> to vector<8x128xf32>
      %102 = vector.shape_cast %99 : vector<8x128xf32> to vector<1x1x1x8x128xf32>
      tpu.vector_store %arg6[%c0_80, %c0_81, %c2_82, %c0_83, %c0_84], %102 {strides = array<i32>} : memref<1x1x4x8x128xf32, #tpu.memory_space<vmem>>, vector<1x1x1x8x128xf32>,
      %c3_i32 = arith.constant 3 : i32
      %103 = vector.broadcast %c3_i32 : i32 to vector<8x128xi32>
      %104 = arith.cmpi eq, %35, %103 : vector<8x128xi32>
      %105 = arith.extui %104 : vector<8x128xi1> to vector<8x128xi32>
      %106 = arith.sitofp %105 : vector<8x128xi32> to vector<8x128xf32>
      %c0_85 = arith.constant 0 : index
      %c0_86 = arith.constant 0 : index
      %c3_87 = arith.constant 3 : index
      %c0_88 = arith.constant 0 : index
      %c0_89 = arith.constant 0 : index
      %107 = vector.load %arg5[%c0_85, %c0_86, %c3_87, %c0_88, %c0_89] : memref<1x1x4x8x128xf32, #tpu.memory_space<vmem>>, vector<1x1x1x8x128xf32>
      %108 = vector.shape_cast %107 : vector<1x1x1x8x128xf32> to vector<8x128xf32>
      %cst_90 = arith.constant 0.000000e+00 : f32
      %109 = vector.broadcast %cst_90 : f32 to vector<8x128xf32>
      %110 = arith.select %104, %33, %109 : vector<8x128xi1>, vector<8x128xf32>
      %111 = arith.addf %108, %110 : vector<8x128xf32>
      %c0_91 = arith.constant 0 : index
      %c0_92 = arith.constant 0 : index
      %c3_93 = arith.constant 3 : index
      %c0_94 = arith.constant 0 : index
      %c0_95 = arith.constant 0 : index
      %112 = vector.load %arg5[%c0_91, %c0_92, %c3_93, %c0_94, %c0_95] : memref<1x1x4x8x128xf32, #tpu.memory_space<vmem>>, vector<1x1x1x8x128xf32>
      %113 = vector.shape_cast %112 : vector<1x1x1x8x128xf32> to vector<8x128xf32>
      %114 = vector.shape_cast %111 : vector<8x128xf32> to vector<1x1x1x8x128xf32>
      tpu.vector_store %arg5[%c0_91, %c0_92, %c3_93, %c0_94, %c0_95], %114 {strides = array<i32>} : memref<1x1x4x8x128xf32, #tpu.memory_space<vmem>>, vector<1x1x1x8x128xf32>,
      %c0_96 = arith.constant 0 : index
      %c0_97 = arith.constant 0 : index
      %c3_98 = arith.constant 3 : index
      %c0_99 = arith.constant 0 : index
      %c0_100 = arith.constant 0 : index
      %115 = vector.load %arg6[%c0_96, %c0_97, %c3_98, %c0_99, %c0_100] : memref<1x1x4x8x128xf32, #tpu.memory_space<vmem>>, vector<1x1x1x8x128xf32>
      %116 = vector.shape_cast %115 : vector<1x1x1x8x128xf32> to vector<8x128xf32>
      %117 = arith.addf %33, %106 : vector<8x128xf32>
      %118 = arith.addf %116, %117 : vector<8x128xf32>
      %c0_101 = arith.constant 0 : index
      %c0_102 = arith.constant 0 : index
      %c3_103 = arith.constant 3 : index
      %c0_104 = arith.constant 0 : index
      %c0_105 = arith.constant 0 : index
      %119 = vector.load %arg6[%c0_101, %c0_102, %c3_103, %c0_104, %c0_105] : memref<1x1x4x8x128xf32, #tpu.memory_space<vmem>>, vector<1x1x1x8x128xf32>
      %120 = vector.shape_cast %119 : vector<1x1x1x8x128xf32> to vector<8x128xf32>
      %121 = vector.shape_cast %118 : vector<8x128xf32> to vector<1x1x1x8x128xf32>
      tpu.vector_store %arg6[%c0_101, %c0_102, %c3_103, %c0_104, %c0_105], %121 {strides = array<i32>} : memref<1x1x4x8x128xf32, #tpu.memory_space<vmem>>, vector<1x1x1x8x128xf32>,
    } else {
    }
    %c256_i32_18 = arith.constant 256 : i32
    %43 = arith.cmpi sgt, %39, %c256_i32_18 : i32
    %44 = arith.extui %43 : i1 to i32
    %c0_i32_19 = arith.constant 0 : i32
    %45 = arith.cmpi ne, %44, %c0_i32_19 : i32
    scf.if %45 {
      %46 = tpu.iota {dimensions = array<i32: 0>} : vector<8x128xi32>
      %c128_i32 = arith.constant 128 : i32
      %47 = vector.broadcast %c128_i32 : i32 to vector<8x128xi32>
      %48 = arith.muli %46, %47 : vector<8x128xi32>
      %49 = vector.broadcast %38 : i32 to vector<8x128xi32>
      %50 = arith.addi %49, %48 : vector<8x128xi32>
      %51 = tpu.iota {dimensions = array<i32: 1>} : vector<8x128xi32>
      %52 = arith.addi %50, %51 : vector<8x128xi32>
      %c256_i32_20 = arith.constant 256 : i32
      %53 = vector.broadcast %c256_i32_20 : i32 to vector<8x128xi32>
      %54 = arith.cmpi slt, %52, %53 : vector<8x128xi32>
      %cst_21 = arith.constant 0.000000e+00 : f32
      %55 = vector.broadcast %cst_21 : f32 to vector<8x128xf32>
      %56 = arith.select %54, %30, %55 : vector<8x128xi1>, vector<8x128xf32>
      %cst_22 = arith.constant 0.000000e+00 : f32
      %57 = vector.broadcast %cst_22 : f32 to vector<8x128xf32>
      %58 = arith.select %54, %31, %57 : vector<8x128xi1>, vector<8x128xf32>
      %cst_23 = arith.constant 0.000000e+00 : f32
      %59 = vector.broadcast %cst_23 : f32 to vector<8x128xf32>
      %60 = arith.select %54, %32, %59 : vector<8x128xi1>, vector<8x128xf32>
      %cst_24 = arith.constant 0.000000e+00 : f32
      %61 = vector.broadcast %cst_24 : f32 to vector<8x128xf32>
      %62 = arith.select %54, %33, %61 : vector<8x128xi1>, vector<8x128xf32>
      %c0_i32_25 = arith.constant 0 : i32
      %63 = vector.broadcast %c0_i32_25 : i32 to vector<8x128xi32>
      %64 = arith.cmpi eq, %35, %63 : vector<8x128xi32>
      %65 = arith.extui %64 : vector<8x128xi1> to vector<8x128xi32>
      %66 = arith.sitofp %65 : vector<8x128xi32> to vector<8x128xf32>
      %c0_26 = arith.constant 0 : index
      %c0_27 = arith.constant 0 : index
      %c0_28 = arith.constant 0 : index
      %c0_29 = arith.constant 0 : index
      %c0_30 = arith.constant 0 : index
      %67 = vector.load %arg5[%c0_26, %c0_27, %c0_28, %c0_29, %c0_30] : memref<1x1x4x8x128xf32, #tpu.memory_space<vmem>>, vector<1x1x1x8x128xf32>
      %68 = vector.shape_cast %67 : vector<1x1x1x8x128xf32> to vector<8x128xf32>
      %cst_31 = arith.constant 0.000000e+00 : f32
      %69 = vector.broadcast %cst_31 : f32 to vector<8x128xf32>
      %70 = arith.select %64, %30, %69 : vector<8x128xi1>, vector<8x128xf32>
      %71 = arith.addf %68, %70 : vector<8x128xf32>
      %c0_32 = arith.constant 0 : index
      %c0_33 = arith.constant 0 : index
      %c0_34 = arith.constant 0 : index
      %c0_35 = arith.constant 0 : index
      %c0_36 = arith.constant 0 : index
      %72 = vector.load %arg5[%c0_32, %c0_33, %c0_34, %c0_35, %c0_36] : memref<1x1x4x8x128xf32, #tpu.memory_space<vmem>>, vector<1x1x1x8x128xf32>
      %73 = vector.shape_cast %72 : vector<1x1x1x8x128xf32> to vector<8x128xf32>
      %74 = vector.shape_cast %71 : vector<8x128xf32> to vector<1x1x1x8x128xf32>
      tpu.vector_store %arg5[%c0_32, %c0_33, %c0_34, %c0_35, %c0_36], %74 {strides = array<i32>} : memref<1x1x4x8x128xf32, #tpu.memory_space<vmem>>, vector<1x1x1x8x128xf32>,
      %c0_37 = arith.constant 0 : index
      %c0_38 = arith.constant 0 : index
      %c0_39 = arith.constant 0 : index
      %c0_40 = arith.constant 0 : index
      %c0_41 = arith.constant 0 : index
      %75 = vector.load %arg6[%c0_37, %c0_38, %c0_39, %c0_40, %c0_41] : memref<1x1x4x8x128xf32, #tpu.memory_space<vmem>>, vector<1x1x1x8x128xf32>
      %76 = vector.shape_cast %75 : vector<1x1x1x8x128xf32> to vector<8x128xf32>
      %77 = arith.addf %56, %66 : vector<8x128xf32>
      %78 = arith.addf %76, %77 : vector<8x128xf32>
      %c0_42 = arith.constant 0 : index
      %c0_43 = arith.constant 0 : index
      %c0_44 = arith.constant 0 : index
      %c0_45 = arith.constant 0 : index
      %c0_46 = arith.constant 0 : index
      %79 = vector.load %arg6[%c0_42, %c0_43, %c0_44, %c0_45, %c0_46] : memref<1x1x4x8x128xf32, #tpu.memory_space<vmem>>, vector<1x1x1x8x128xf32>
      %80 = vector.shape_cast %79 : vector<1x1x1x8x128xf32> to vector<8x128xf32>
      %81 = vector.shape_cast %78 : vector<8x128xf32> to vector<1x1x1x8x128xf32>
      tpu.vector_store %arg6[%c0_42, %c0_43, %c0_44, %c0_45, %c0_46], %81 {strides = array<i32>} : memref<1x1x4x8x128xf32, #tpu.memory_space<vmem>>, vector<1x1x1x8x128xf32>,
      %c1_i32_47 = arith.constant 1 : i32
      %82 = vector.broadcast %c1_i32_47 : i32 to vector<8x128xi32>
      %83 = arith.cmpi eq, %35, %82 : vector<8x128xi32>
      %84 = arith.extui %83 : vector<8x128xi1> to vector<8x128xi32>
      %85 = arith.sitofp %84 : vector<8x128xi32> to vector<8x128xf32>
      %c0_48 = arith.constant 0 : index
      %c0_49 = arith.constant 0 : index
      %c1_50 = arith.constant 1 : index
      %c0_51 = arith.constant 0 : index
      %c0_52 = arith.constant 0 : index
      %86 = vector.load %arg5[%c0_48, %c0_49, %c1_50, %c0_51, %c0_52] : memref<1x1x4x8x128xf32, #tpu.memory_space<vmem>>, vector<1x1x1x8x128xf32>
      %87 = vector.shape_cast %86 : vector<1x1x1x8x128xf32> to vector<8x128xf32>
      %cst_53 = arith.constant 0.000000e+00 : f32
      %88 = vector.broadcast %cst_53 : f32 to vector<8x128xf32>
      %89 = arith.select %83, %31, %88 : vector<8x128xi1>, vector<8x128xf32>
      %90 = arith.addf %87, %89 : vector<8x128xf32>
      %c0_54 = arith.constant 0 : index
      %c0_55 = arith.constant 0 : index
      %c1_56 = arith.constant 1 : index
      %c0_57 = arith.constant 0 : index
      %c0_58 = arith.constant 0 : index
      %91 = vector.load %arg5[%c0_54, %c0_55, %c1_56, %c0_57, %c0_58] : memref<1x1x4x8x128xf32, #tpu.memory_space<vmem>>, vector<1x1x1x8x128xf32>
      %92 = vector.shape_cast %91 : vector<1x1x1x8x128xf32> to vector<8x128xf32>
      %93 = vector.shape_cast %90 : vector<8x128xf32> to vector<1x1x1x8x128xf32>
      tpu.vector_store %arg5[%c0_54, %c0_55, %c1_56, %c0_57, %c0_58], %93 {strides = array<i32>} : memref<1x1x4x8x128xf32, #tpu.memory_space<vmem>>, vector<1x1x1x8x128xf32>,
      %c0_59 = arith.constant 0 : index
      %c0_60 = arith.constant 0 : index
      %c1_61 = arith.constant 1 : index
      %c0_62 = arith.constant 0 : index
      %c0_63 = arith.constant 0 : index
      %94 = vector.load %arg6[%c0_59, %c0_60, %c1_61, %c0_62, %c0_63] : memref<1x1x4x8x128xf32, #tpu.memory_space<vmem>>, vector<1x1x1x8x128xf32>
      %95 = vector.shape_cast %94 : vector<1x1x1x8x128xf32> to vector<8x128xf32>
      %96 = arith.addf %58, %85 : vector<8x128xf32>
      %97 = arith.addf %95, %96 : vector<8x128xf32>
      %c0_64 = arith.constant 0 : index
      %c0_65 = arith.constant 0 : index
      %c1_66 = arith.constant 1 : index
      %c0_67 = arith.constant 0 : index
      %c0_68 = arith.constant 0 : index
      %98 = vector.load %arg6[%c0_64, %c0_65, %c1_66, %c0_67, %c0_68] : memref<1x1x4x8x128xf32, #tpu.memory_space<vmem>>, vector<1x1x1x8x128xf32>
      %99 = vector.shape_cast %98 : vector<1x1x1x8x128xf32> to vector<8x128xf32>
      %100 = vector.shape_cast %97 : vector<8x128xf32> to vector<1x1x1x8x128xf32>
      tpu.vector_store %arg6[%c0_64, %c0_65, %c1_66, %c0_67, %c0_68], %100 {strides = array<i32>} : memref<1x1x4x8x128xf32, #tpu.memory_space<vmem>>, vector<1x1x1x8x128xf32>,
      %c2_i32 = arith.constant 2 : i32
      %101 = vector.broadcast %c2_i32 : i32 to vector<8x128xi32>
      %102 = arith.cmpi eq, %35, %101 : vector<8x128xi32>
      %103 = arith.extui %102 : vector<8x128xi1> to vector<8x128xi32>
      %104 = arith.sitofp %103 : vector<8x128xi32> to vector<8x128xf32>
      %c0_69 = arith.constant 0 : index
      %c0_70 = arith.constant 0 : index
      %c2_71 = arith.constant 2 : index
      %c0_72 = arith.constant 0 : index
      %c0_73 = arith.constant 0 : index
      %105 = vector.load %arg5[%c0_69, %c0_70, %c2_71, %c0_72, %c0_73] : memref<1x1x4x8x128xf32, #tpu.memory_space<vmem>>, vector<1x1x1x8x128xf32>
      %106 = vector.shape_cast %105 : vector<1x1x1x8x128xf32> to vector<8x128xf32>
      %cst_74 = arith.constant 0.000000e+00 : f32
      %107 = vector.broadcast %cst_74 : f32 to vector<8x128xf32>
      %108 = arith.select %102, %32, %107 : vector<8x128xi1>, vector<8x128xf32>
      %109 = arith.addf %106, %108 : vector<8x128xf32>
      %c0_75 = arith.constant 0 : index
      %c0_76 = arith.constant 0 : index
      %c2_77 = arith.constant 2 : index
      %c0_78 = arith.constant 0 : index
      %c0_79 = arith.constant 0 : index
      %110 = vector.load %arg5[%c0_75, %c0_76, %c2_77, %c0_78, %c0_79] : memref<1x1x4x8x128xf32, #tpu.memory_space<vmem>>, vector<1x1x1x8x128xf32>
      %111 = vector.shape_cast %110 : vector<1x1x1x8x128xf32> to vector<8x128xf32>
      %112 = vector.shape_cast %109 : vector<8x128xf32> to vector<1x1x1x8x128xf32>
      tpu.vector_store %arg5[%c0_75, %c0_76, %c2_77, %c0_78, %c0_79], %112 {strides = array<i32>} : memref<1x1x4x8x128xf32, #tpu.memory_space<vmem>>, vector<1x1x1x8x128xf32>,
      %c0_80 = arith.constant 0 : index
      %c0_81 = arith.constant 0 : index
      %c2_82 = arith.constant 2 : index
      %c0_83 = arith.constant 0 : index
      %c0_84 = arith.constant 0 : index
      %113 = vector.load %arg6[%c0_80, %c0_81, %c2_82, %c0_83, %c0_84] : memref<1x1x4x8x128xf32, #tpu.memory_space<vmem>>, vector<1x1x1x8x128xf32>
      %114 = vector.shape_cast %113 : vector<1x1x1x8x128xf32> to vector<8x128xf32>
      %115 = arith.addf %60, %104 : vector<8x128xf32>
      %116 = arith.addf %114, %115 : vector<8x128xf32>
      %c0_85 = arith.constant 0 : index
      %c0_86 = arith.constant 0 : index
      %c2_87 = arith.constant 2 : index
      %c0_88 = arith.constant 0 : index
      %c0_89 = arith.constant 0 : index
      %117 = vector.load %arg6[%c0_85, %c0_86, %c2_87, %c0_88, %c0_89] : memref<1x1x4x8x128xf32, #tpu.memory_space<vmem>>, vector<1x1x1x8x128xf32>
      %118 = vector.shape_cast %117 : vector<1x1x1x8x128xf32> to vector<8x128xf32>
      %119 = vector.shape_cast %116 : vector<8x128xf32> to vector<1x1x1x8x128xf32>
      tpu.vector_store %arg6[%c0_85, %c0_86, %c2_87, %c0_88, %c0_89], %119 {strides = array<i32>} : memref<1x1x4x8x128xf32, #tpu.memory_space<vmem>>, vector<1x1x1x8x128xf32>,
      %c3_i32 = arith.constant 3 : i32
      %120 = vector.broadcast %c3_i32 : i32 to vector<8x128xi32>
      %121 = arith.cmpi eq, %35, %120 : vector<8x128xi32>
      %122 = arith.extui %121 : vector<8x128xi1> to vector<8x128xi32>
      %123 = arith.sitofp %122 : vector<8x128xi32> to vector<8x128xf32>
      %c0_90 = arith.constant 0 : index
      %c0_91 = arith.constant 0 : index
      %c3_92 = arith.constant 3 : index
      %c0_93 = arith.constant 0 : index
      %c0_94 = arith.constant 0 : index
      %124 = vector.load %arg5[%c0_90, %c0_91, %c3_92, %c0_93, %c0_94] : memref<1x1x4x8x128xf32, #tpu.memory_space<vmem>>, vector<1x1x1x8x128xf32>
      %125 = vector.shape_cast %124 : vector<1x1x1x8x128xf32> to vector<8x128xf32>
      %cst_95 = arith.constant 0.000000e+00 : f32
      %126 = vector.broadcast %cst_95 : f32 to vector<8x128xf32>
      %127 = arith.select %121, %33, %126 : vector<8x128xi1>, vector<8x128xf32>
      %128 = arith.addf %125, %127 : vector<8x128xf32>
      %c0_96 = arith.constant 0 : index
      %c0_97 = arith.constant 0 : index
      %c3_98 = arith.constant 3 : index
      %c0_99 = arith.constant 0 : index
      %c0_100 = arith.constant 0 : index
      %129 = vector.load %arg5[%c0_96, %c0_97, %c3_98, %c0_99, %c0_100] : memref<1x1x4x8x128xf32, #tpu.memory_space<vmem>>, vector<1x1x1x8x128xf32>
      %130 = vector.shape_cast %129 : vector<1x1x1x8x128xf32> to vector<8x128xf32>
      %131 = vector.shape_cast %128 : vector<8x128xf32> to vector<1x1x1x8x128xf32>
      tpu.vector_store %arg5[%c0_96, %c0_97, %c3_98, %c0_99, %c0_100], %131 {strides = array<i32>} : memref<1x1x4x8x128xf32, #tpu.memory_space<vmem>>, vector<1x1x1x8x128xf32>,
      %c0_101 = arith.constant 0 : index
      %c0_102 = arith.constant 0 : index
      %c3_103 = arith.constant 3 : index
      %c0_104 = arith.constant 0 : index
      %c0_105 = arith.constant 0 : index
      %132 = vector.load %arg6[%c0_101, %c0_102, %c3_103, %c0_104, %c0_105] : memref<1x1x4x8x128xf32, #tpu.memory_space<vmem>>, vector<1x1x1x8x128xf32>
      %133 = vector.shape_cast %132 : vector<1x1x1x8x128xf32> to vector<8x128xf32>
      %134 = arith.addf %62, %123 : vector<8x128xf32>
      %135 = arith.addf %133, %134 : vector<8x128xf32>
      %c0_106 = arith.constant 0 : index
      %c0_107 = arith.constant 0 : index
      %c3_108 = arith.constant 3 : index
      %c0_109 = arith.constant 0 : index
      %c0_110 = arith.constant 0 : index
      %136 = vector.load %arg6[%c0_106, %c0_107, %c3_108, %c0_109, %c0_110] : memref<1x1x4x8x128xf32, #tpu.memory_space<vmem>>, vector<1x1x1x8x128xf32>
      %137 = vector.shape_cast %136 : vector<1x1x1x8x128xf32> to vector<8x128xf32>
      %138 = vector.shape_cast %135 : vector<8x128xf32> to vector<1x1x1x8x128xf32>
      tpu.vector_store %arg6[%c0_106, %c0_107, %c3_108, %c0_109, %c0_110], %138 {strides = array<i32>} : memref<1x1x4x8x128xf32, #tpu.memory_space<vmem>>, vector<1x1x1x8x128xf32>,
    } else {
    }
    return
  }
  func.func @transform_0(%arg0: i32, %arg1: i32, %arg2: i32) -> (i32, i32, i32, i32) {
    %c1_i32 = arith.constant 1 : i32
    %0 = arith.muli %arg1, %c1_i32 : i32
    %1 = arith.addi %0, %arg2 : i32
    %c0_i32 = arith.constant 0 : i32
    %c0_i32_0 = arith.constant 0 : i32
    %c0_i32_1 = arith.constant 0 : i32
    return %arg0, %c0_i32, %1, %c0_i32_0 : i32, i32, i32, i32
  }
  func.func @transform_1(%arg0: i32, %arg1: i32, %arg2: i32) -> (i32, i32, i32) {
    %c1_i32 = arith.constant 1 : i32
    %0 = arith.muli %arg1, %c1_i32 : i32
    %1 = arith.addi %0, %arg2 : i32
    %c0_i32 = arith.constant 0 : i32
    %c0_i32_0 = arith.constant 0 : i32
    return %arg0, %1, %c0_i32 : i32, i32, i32
  }
  func.func @transform_2(%arg0: i32, %arg1: i32, %arg2: i32) -> (i32, i32, i32, i32, i32) {
    %c0_i32 = arith.constant 0 : i32
    %c0_i32_0 = arith.constant 0 : i32
    %c0_i32_1 = arith.constant 0 : i32
    %c0_i32_2 = arith.constant 0 : i32
    return %arg0, %arg1, %c0_i32, %c0_i32_0, %c0_i32_1 : i32, i32, i32, i32, i32
  }
  func.func @transform_3(%arg0: i32, %arg1: i32, %arg2: i32) -> (i32, i32, i32, i32, i32) {
    %c0_i32 = arith.constant 0 : i32
    %c0_i32_0 = arith.constant 0 : i32
    %c0_i32_1 = arith.constant 0 : i32
    %c0_i32_2 = arith.constant 0 : i32
    return %arg0, %arg1, %c0_i32, %c0_i32_0, %c0_i32_1 : i32, i32, i32, i32, i32
  }
}

</mosaic_0001>

<llo_original>
// kernel: tpu_custom_call.1
$region0: #{tpu_custom_call.1}
  #allocation0 [shape = 'u32[]', space=smem, size = 0x4, offset = 0x4, fixed_abs, tag = 'smem constant byte address 0x4 - core index']
  #allocation1 [shape = 'u32[72,128]{1,0:T(1,128)}', space=vmem, size = 0x9000, scoped, tag = 'internal scratch']
  %s0 = inlined_call_operand.hbm [shape: f32[2,4,8,128], index: 0, kind: input, shape index: {}]
  %s1 = inlined_call_operand.hbm [shape: s32[2,8,128], index: 1, kind: input, shape index: {}]
  %s2 = inlined_call_operand.hbm [shape: f32[2,1,4,8,128], index: 2, kind: output, shape index: {0}]
  %s3 = inlined_call_operand.hbm [shape: f32[2,1,4,8,128], index: 3, kind: output, shape index: {1}]
  %4 = xla_tuple %s2, %s3
  %s5 = sld [smem:[#allocation0]]
  $region69: #{tpu_custom_call.1} parent=0
    _
  %s7 = ssub.s32 1, %s5
  %s8 = scalar_select 0, %s7, %s5
  $region1: #{tpu_custom_call.1} parent=0
    #allocation2 [shape = 'u8[32768]{0}', space=vmem, size = 0x8000, scoped, tag = 'input window, operand 0']
    #allocation3 [shape = 's32[2]{0}', space=sflag, size = 0x8, scoped, tag = 'scoped memory for tpu_custom_call.1']
    #allocation4 [shape = 's32[2]{0}', space=sflag, size = 0x8, scoped, tag = 'scoped memory for tpu_custom_call.1']
    #allocation5 [shape = 'u8[8192]{0}', space=vmem, size = 0x2000, scoped, tag = 'input window, operand 1']
    #allocation6 [shape = 's32[2]{0}', space=sflag, size = 0x8, scoped, tag = 'scoped memory for tpu_custom_call.1']
    #allocation7 [shape = 'u8[32768]{0}', space=vmem, size = 0x8000, scoped, tag = 'output window, operand 0']
    #allocation8 [shape = 'u8[32768]{0}', space=vmem, size = 0x8000, scoped, tag = 'output window, operand 1']
    #allocation9 [shape = 's32[2]{0}', space=sflag, size = 0x8, scoped, tag = 'scoped memory for tpu_custom_call.1']
    %9 = vsyncpa [#allocation3], 0
    %s10 = scalar_lea.sflag [#allocation3], 1
    %11 = vsyncpa %s10, 0
    %12 = vsyncpa [#allocation6], 0
    %s13 = scalar_lea.sflag [#allocation6], 1
    %14 = vsyncpa %s13, 0
    %15 = vsyncpa [#allocation4], 0
    %s16 = scalar_lea.sflag [#allocation4], 1
    %17 = vsyncpa %s16, 0
    %18 = vsyncpa [#allocation9], 0
    %s19 = scalar_lea.sflag [#allocation9], 1
    %20 = vsyncpa %s19, 0
    loop: start=0, step=1, limit=4
    $region2: #{tpu_custom_call.1} parent=1 // loop_pre_header
      _
    $region3: #{tpu_custom_call.1} parent=1 // loop_header
      %s22 = sphi 0, %s26
      %p23 = scmp.ge.s32.totalorder %s22, 4
      %s29 = sphi 0, %s48
      %s30 = sphi 0, %s44
      %s31 = sphi 0, %s40
      %s32 = sphi 0, %s29
      %s33 = sphi 0, %s30
      %s34 = sphi 0, %s31
      %s35 = sphi 0, %s32
      %s36 = sphi 0, %s33
      %s37 = sphi 0, %s34
      %s55 = sphi 0, %s57
      %s58 = sphi 0, %s55
      %s59 = sphi 0, %s58
      %s75 = sphi 0, %s59
      %s85 = sphi 0, %s87
      %s88 = sphi 0, %s85
      %s89 = sphi 0, %s88
      %s105 = sphi 0, %s89
      %s113 = sphi 0, %s115
      %s116 = sphi 0, %s113
      %s117 = sphi 0, %s116
      %s133 = sphi 0, %s117
      %s141 = sphi 0, %s143
      %s144 = sphi 0, %s141
      %s145 = sphi 0, %s144
      %s161 = sphi 0, %s145
    $region4: #{tpu_custom_call.1} parent=1 // loop_header_branch
      %25 = sbr.rel (%p23) target = $region8
    $region5: #{tpu_custom_call.1} parent=1 // loop_body
      %s27 = ssub.s32 %s22, 1
      %s28 = ssub.s32 %s22, 2
      %s38 = sadd.s32 1, %s31
      %p39 = scmp.ge.s32.totalorder %s38, 1
      %s40 = scalar_select %p39, 0, %s38
      %s41 = sadd.s32 1, %s30
      %s42 = scalar_select %p39, %s41, %s30
      %p43 = scmp.ge.s32.totalorder %s42, 1
      %s44 = scalar_select %p43, 0, %s42
      %s45 = sadd.s32 1, %s29
      %s46 = scalar_select %p43, %s45, %s29
      %p47 = scmp.ge.s32.totalorder %s46, 2
      %s48 = scalar_select %p47, 0, %s46
      %s49 = sadd.s32 %s30, %s31
      %s50 = sadd.s32 %s44, %s40
      %s51 = ssub.s32 %s29, %s48
      %s52 = ssub.s32 %s49, %s50
      %s53 = sor.u32 %s51, %s52
      %p54 = scmp.eq.s32.totalorder %s53, 0
      %s56 = sadd.s32 %s55, 1
      %s57 = scalar_select %p54, %s55, %s56
      %p60 = pneg %p54
      %p61 = scmp.eq.s32.totalorder %s22, 1
      %p62 = por %p60, %p61
      %p63 = scmp.ne.s32.totalorder %s55, %s58
      %p64 = scmp.eq.s32.totalorder %s22, 0
      %p65 = por %p63, %p64
      %p66 = scmp.ne.s32.totalorder %s55, %s58
      %p67 = scmp.eq.s32.totalorder %s27, 1
      %p68 = por %p66, %p67
      %p69 = scmp.ne.s32.totalorder %s58, %s59
      %p70 = scmp.eq.s32.totalorder %s27, 0
      %p71 = por %p69, %p70
      %p72 = scmp.ne.s32.totalorder %s58, %s59
      %p73 = scmp.eq.s32.totalorder %s28, 1
      %p74 = por %p72, %p73
      %p76 = scmp.ne.s32.totalorder %s59, %s75
      %p77 = scmp.eq.s32.totalorder %s28, 0
      %p78 = por %p76, %p77
      %s79 = sadd.s32 %s30, %s31
      %s80 = sadd.s32 %s44, %s40
      %s81 = ssub.s32 %s29, %s48
      %s82 = ssub.s32 %s79, %s80
      %s83 = sor.u32 %s81, %s82
      %p84 = scmp.eq.s32.totalorder %s83, 0
      %s86 = sadd.s32 %s85, 1
      %s87 = scalar_select %p84, %s85, %s86
      %p90 = pneg %p84
      %p91 = scmp.eq.s32.totalorder %s22, 1
      %p92 = por %p90, %p91
      %p93 = scmp.ne.s32.totalorder %s85, %s88
      %p94 = scmp.eq.s32.totalorder %s22, 0
      %p95 = por %p93, %p94
      %p96 = scmp.ne.s32.totalorder %s85, %s88
      %p97 = scmp.eq.s32.totalorder %s27, 1
      %p98 = por %p96, %p97
      %p99 = scmp.ne.s32.totalorder %s88, %s89
      %p100 = scmp.eq.s32.totalorder %s27, 0
      %p101 = por %p99, %p100
      %p102 = scmp.ne.s32.totalorder %s88, %s89
      %p103 = scmp.eq.s32.totalorder %s28, 1
      %p104 = por %p102, %p103
      %p106 = scmp.ne.s32.totalorder %s89, %s105
      %p107 = scmp.eq.s32.totalorder %s28, 0
      %p108 = por %p106, %p107
      %s109 = ssub.s32 %s29, %s48
      %s110 = ssub.s32 %s30, %s44
      %s111 = sor.u32 %s109, %s110
      %p112 = scmp.eq.s32.totalorder %s111, 0
      %s114 = sadd.s32 %s113, 1
      %s115 = scalar_select %p112, %s113, %s114
      %p118 = pneg %p112
      %p119 = scmp.eq.s32.totalorder %s22, 1
      %p120 = por %p118, %p119
      %p121 = scmp.ne.s32.totalorder %s113, %s116
      %p122 = scmp.eq.s32.totalorder %s22, 0
      %p123 = por %p121, %p122
      %p124 = scmp.ne.s32.totalorder %s113, %s116
      %p125 = scmp.eq.s32.totalorder %s27, 1
      %p126 = por %p124, %p125
      %p127 = scmp.ne.s32.totalorder %s116, %s117
      %p128 = scmp.eq.s32.totalorder %s27, 0
      %p129 = por %p127, %p128
      %p130 = scmp.ne.s32.totalorder %s116, %s117
      %p131 = scmp.eq.s32.totalorder %s28, 1
      %p132 = por %p130, %p131
      %p134 = scmp.ne.s32.totalorder %s117, %s133
      %p135 = scmp.eq.s32.totalorder %s28, 0
      %p136 = por %p134, %p135
      %s137 = ssub.s32 %s29, %s48
      %s138 = ssub.s32 %s30, %s44
      %s139 = sor.u32 %s137, %s138
      %p140 = scmp.eq.s32.totalorder %s139, 0
      %s142 = sadd.s32 %s141, 1
      %s143 = scalar_select %p140, %s141, %s142
      %p146 = pneg %p140
      %p147 = scmp.eq.s32.totalorder %s22, 1
      %p148 = por %p146, %p147
      %p149 = scmp.ne.s32.totalorder %s141, %s144
      %p150 = scmp.eq.s32.totalorder %s22, 0
      %p151 = por %p149, %p150
      %p152 = scmp.ne.s32.totalorder %s141, %s144
      %p153 = scmp.eq.s32.totalorder %s27, 1
      %p154 = por %p152, %p153
      %p155 = scmp.ne.s32.totalorder %s144, %s145
      %p156 = scmp.eq.s32.totalorder %s27, 0
      %p157 = por %p155, %p156
      %p158 = scmp.ne.s32.totalorder %s144, %s145
      %p159 = scmp.eq.s32.totalorder %s28, 1
      %p160 = por %p158, %p159
      %p162 = scmp.ne.s32.totalorder %s145, %s161
      %p163 = scmp.eq.s32.totalorder %s28, 0
      %p164 = por %p162, %p163
      %p165 = scmp.le.s32.totalorder 1, %s22
      %p166 = scmp.lt.s32.totalorder %s22, 3
      %p167 = pnand %p165, %p166
      %p168 = pneg %p167
      // Predicated region
      $region9: #{tpu_custom_call.1} parent=5 // pred_check
        _
      $region10: #{tpu_custom_call.1} parent=5 // pred_check_branch
        %170 = sbr.rel (%p167) target = $region12
      $region11: #{tpu_custom_call.1} parent=5 // pred_region
        %s171 = ssub.s32 %s22, 1
      $region12: #{tpu_custom_call.1} parent=5 // pred_fallthru
        _
      %p172 = scmp.lt.s32.totalorder %s22, 2
      // Predicated region
      $region13: #{tpu_custom_call.1} parent=5 // pred_check
        %p173 = pneg %p172
      $region14: #{tpu_custom_call.1} parent=5 // pred_check_branch
        %175 = sbr.rel (%p173) target = $region16
      $region15: #{tpu_custom_call.1} parent=5 // pred_region
        // Predicated region
        $region17: #{tpu_custom_call.1} parent=15 // pred_check
          %p176 = pneg %p65
        $region18: #{tpu_custom_call.1} parent=15 // pred_check_branch
          %178 = sbr.rel (%p176) target = $region20
        $region19: #{tpu_custom_call.1} parent=15 // pred_region
          %s179 = sand.u32 %s55, 1
          %s180 = scalar_lea.sflag [#allocation3], %s179
          %s181 = sand.u32 %s55, 1
          %s182 = smul.addr %s181, 32
          %s183 = scalar_lea.vmem [#allocation2], %s182
          %s184 = sadd.s32 %s30, %s31
          %186 = vsyncadd %s180, 0
          %s187 = smul.addr %s29, 4
          %s188 = sadd.s32 %s184, %s187
          %s189 = smul.addr %s188, 8
          %s190 = scalar_lea.hbm %s0, %s189
          %s191 = sshll.u32 %s190, 4
          %s192 = int_to_ptr.hbm [resolvable:$true] %s191
          %s193 = sshll.u32 %s183, 4
          %s194 = int_to_ptr.vmem [resolvable:$true] %s193
          %199 = dma.hbm_to_vmem [thread:$0]  %s192, 512, %s194, %s180, 128, 128, 8
        $region20: #{tpu_custom_call.1} parent=15 // pred_fallthru
          _
        // Predicated region
        $region21: #{tpu_custom_call.1} parent=15 // pred_check
          %p200 = pneg %p95
        $region22: #{tpu_custom_call.1} parent=15 // pred_check_branch
          %202 = sbr.rel (%p200) target = $region24
        $region23: #{tpu_custom_call.1} parent=15 // pred_region
          %s203 = sand.u32 %s85, 1
          %s204 = scalar_lea.sflag [#allocation6], %s203
          %s205 = sand.u32 %s85, 1
          %s206 = smul.addr %s205, 8
          %s207 = scalar_lea.vmem [#allocation5], %s206
          %s208 = sadd.s32 %s30, %s31
          %210 = vsyncadd %s204, 0
          %s211 = sadd.s32 %s208, %s29
          %s212 = smul.addr %s211, 8
          %s213 = scalar_lea.hbm %s1, %s212
          %s215 = sshll.u32 %s213, 4
          %s216 = int_to_ptr.hbm [resolvable:$true] %s215
          %s217 = sshll.u32 %s207, 4
          %s218 = int_to_ptr.vmem [resolvable:$true] %s217
          %220 = dma.hbm_to_vmem [thread:$0]  %s216, 128, %s218, %s204
        $region24: #{tpu_custom_call.1} parent=15 // pred_fallthru
          _
      $region16: #{tpu_custom_call.1} parent=5 // pred_fallthru
        _
      %p221 = scmp.le.s32.totalorder 1, %s22
      %p222 = scmp.lt.s32.totalorder %s22, 3
      %p223 = pnand %p221, %p222
      %p224 = pneg %p223
      // Predicated region
      $region25: #{tpu_custom_call.1} parent=5 // pred_check
        _
      $region26: #{tpu_custom_call.1} parent=5 // pred_check_branch
        %226 = sbr.rel (%p223) target = $region28
      $region27: #{tpu_custom_call.1} parent=5 // pred_region
        %s227 = ssub.s32 %s22, 1
        %s228 = sand.u32 %s58, 1
        %s229 = scalar_lea.sflag [#allocation3], %s228
        %s230 = sand.u32 %s58, 1
        %s231 = smul.addr %s230, 32
        %s232 = scalar_lea.vmem [#allocation2], %s231
        // Predicated region
        $region29: #{tpu_custom_call.1} parent=27 // pred_check
          %p233 = pneg %p71
        $region30: #{tpu_custom_call.1} parent=27 // pred_check_branch
          %235 = sbr.rel (%p233) target = $region32
        $region31: #{tpu_custom_call.1} parent=27 // pred_region
          %237 = dma.done %s229, 512
        $region32: #{tpu_custom_call.1} parent=27 // pred_fallthru
          _
        %s238 = sand.u32 %s88, 1
        %s239 = scalar_lea.sflag [#allocation6], %s238
        %s240 = sand.u32 %s88, 1
        %s241 = smul.addr %s240, 8
        %s242 = scalar_lea.vmem [#allocation5], %s241
        // Predicated region
        $region33: #{tpu_custom_call.1} parent=27 // pred_check
          %p243 = pneg %p101
        $region34: #{tpu_custom_call.1} parent=27 // pred_check_branch
          %245 = sbr.rel (%p243) target = $region36
        $region35: #{tpu_custom_call.1} parent=27 // pred_region
          %247 = dma.done %s239, 128
        $region36: #{tpu_custom_call.1} parent=27 // pred_fallthru
          _
        %s248 = sand.u32 %s58, 1
        %s249 = scalar_lea.sflag [#allocation3], %s248
        %s250 = sand.u32 %s58, 1
        %s251 = smul.addr %s250, 32
        %s252 = scalar_lea.vmem [#allocation2], %s251
        %p253 = pneg %p71
        %p254 = pneg %p68
        %s255 = sand.u32 %s88, 1
        %s256 = scalar_lea.sflag [#allocation6], %s255
        %s257 = sand.u32 %s88, 1
        %s258 = smul.addr %s257, 8
        %s259 = scalar_lea.vmem [#allocation5], %s258
        %p260 = pneg %p101
        %p261 = pneg %p98
        %p262 = pneg %p129
        %p263 = pneg %p126
        %s264 = sand.u32 %s116, 1
        %s265 = scalar_lea.sflag [#allocation4], %s264
        %s266 = sand.u32 %s116, 1
        %s267 = smul.addr %s266, 32
        %s268 = scalar_lea.vmem [#allocation7], %s267
        %p269 = pneg %p157
        %p270 = pneg %p154
        %s271 = sand.u32 %s144, 1
        %s272 = scalar_lea.sflag [#allocation9], %s271
        %s273 = sand.u32 %s144, 1
        %s274 = smul.addr %s273, 32
        %s275 = scalar_lea.vmem [#allocation8], %s274
        %s276 = sadd.s32 %s33, %s34
        %s277 = sadd.s32 %s33, %s34
        %p278 = scmp.eq.s32.totalorder %s34, 0
        // Predicated region
        $region37: #{tpu_custom_call.1} parent=27 // pred_check
          %p279 = pneg %p278
        $region38: #{tpu_custom_call.1} parent=27 // pred_check_branch
          %281 = sbr.rel (%p279) target = $region40
        $region39: #{tpu_custom_call.1} parent=27 // pred_region
          %282 = vst [vmem:[%s268] sm:$0xff] 0.0
          %283 = vst [vmem:[%s268 + $0x8] sm:$0xff] 0.0
          %284 = vst [vmem:[%s268 + $0x10] sm:$0xff] 0.0
          %285 = vst [vmem:[%s268 + $0x18] sm:$0xff] 0.0
          %286 = vst [vmem:[%s275] sm:$0xff] 0.0
          %287 = vst [vmem:[%s275 + $0x8] sm:$0xff] 0.0
          %288 = vst [vmem:[%s275 + $0x10] sm:$0xff] 0.0
          %289 = vst [vmem:[%s275 + $0x18] sm:$0xff] 0.0
        $region40: #{tpu_custom_call.1} parent=27 // pred_fallthru
          _
        %v290 = vld [vmem:[%s232] sm:$0xff]
        %s291 = scalar_lea.vmem %s232, 8 [#allocation2]
        %v292 = vld [vmem:[%s291] sm:$0xff]
        %s293 = scalar_lea.vmem %s232, 16 [#allocation2]
        %v294 = vld [vmem:[%s293] sm:$0xff]
        %s295 = scalar_lea.vmem %s232, 24 [#allocation2]
        %v296 = vld [vmem:[%s295] sm:$0xff]
        %v297 = vmax.f32 %v290, %v292
        %v298 = vmax.f32 %v297, %v294
        %v299 = vmax.f32 %v298, %v296
        %v300 = vsub.f32 %v290, %v299
        %v301 = vmul.f32 %v300, 1.442695
        %v302 = vpow.pop %v301
        %v303 = vsub.f32 %v292, %v299
        %v304 = vmul.f32 %v303, 1.442695
        %v305 = vpow.pop %v304
        %v306 = vsub.f32 %v294, %v299
        %v307 = vmul.f32 %v306, 1.442695
        %v308 = vpow.pop %v307
        %v309 = vsub.f32 %v296, %v299
        %v310 = vmul.f32 %v309, 1.442695
        %v311 = vpow.pop %v310
        %v312 = vadd.f32 %v302, %v305
        %v313 = vadd.f32 %v312, %v308
        %v314 = vadd.f32 %v313, %v311
        %v315 = vrcp.pop %v314
        %v316 = vmul.f32 %v314, %v315
        %v317 = vsub.f32 2.0, %v316
        %v318 = vmul.f32 %v315, %v317
        %v319 = vmul.f32 %v302, %v318
        %v320 = vmul.f32 %v305, %v318
        %v321 = vmul.f32 %v308, %v318
        %v322 = vmul.f32 %v311, %v318
        %v323 = vld [vmem:[%s242] sm:$0xff]
        %s324 = sadd.s32 %s33, %s34
        %s325 = smul.u32 %s324, 1024
        %s326 = sadd.s32 %s325, 1024
        %p327 = scmp.le.s32.totalorder %s326, 256
        // Predicated region
        $region41: #{tpu_custom_call.1} parent=27 // pred_check
          %p328 = pneg %p327
        $region42: #{tpu_custom_call.1} parent=27 // pred_check_branch
          %330 = sbr.rel (%p328) target = $region44
        $region43: #{tpu_custom_call.1} parent=27 // pred_region
          %vm331 = vcmp.eq.s32.totalorder %v323, 0
          %v332 = vsel %vm331, 1, 0
          %v333 = vcvt.s32.f32 %v332
          %v334 = vld [vmem:[%s268] sm:$0xff]
          %v335 = vsel %vm331, %v319, 0.0
          %v336 = vadd.f32 %v334, %v335
          %337 = vst [vmem:[%s268] sm:$0xff] %v336
          %v338 = vld [vmem:[%s275] sm:$0xff]
          %v339 = vadd.f32 %v319, %v333
          %v340 = vadd.f32 %v338, %v339
          %341 = vst [vmem:[%s275] sm:$0xff] %v340
          %vm342 = vcmp.eq.s32.totalorder %v323, 1
          %v343 = vsel %vm342, 1, 0
          %v344 = vcvt.s32.f32 %v343
          %s345 = scalar_lea.vmem %s268, 8 [#allocation7]
          %v346 = vld [vmem:[%s345] sm:$0xff]
          %v347 = vsel %vm342, %v320, 0.0
          %v348 = vadd.f32 %v346, %v347
          %349 = vst [vmem:[%s345] sm:$0xff] %v348
          %s350 = scalar_lea.vmem %s275, 8 [#allocation8]
          %v351 = vld [vmem:[%s350] sm:$0xff]
          %v352 = vadd.f32 %v320, %v344
          %v353 = vadd.f32 %v351, %v352
          %354 = vst [vmem:[%s350] sm:$0xff] %v353
          %vm355 = vcmp.eq.s32.totalorder %v323, 2
          %v356 = vsel %vm355, 1, 0
          %v357 = vcvt.s32.f32 %v356
          %s358 = scalar_lea.vmem %s268, 16 [#allocation7]
          %v359 = vld [vmem:[%s358] sm:$0xff]
          %v360 = vsel %vm355, %v321, 0.0
          %v361 = vadd.f32 %v359, %v360
          %362 = vst [vmem:[%s358] sm:$0xff] %v361
          %s363 = scalar_lea.vmem %s275, 16 [#allocation8]
          %v364 = vld [vmem:[%s363] sm:$0xff]
          %v365 = vadd.f32 %v321, %v357
          %v366 = vadd.f32 %v364, %v365
          %367 = vst [vmem:[%s363] sm:$0xff] %v366
          %vm368 = vcmp.eq.s32.totalorder %v323, 3
          %v369 = vsel %vm368, 1, 0
          %v370 = vcvt.s32.f32 %v369
          %s371 = scalar_lea.vmem %s268, 24 [#allocation7]
          %v372 = vld [vmem:[%s371] sm:$0xff]
          %v373 = vsel %vm368, %v322, 0.0
          %v374 = vadd.f32 %v372, %v373
          %375 = vst [vmem:[%s371] sm:$0xff] %v374
          %s376 = scalar_lea.vmem %s275, 24 [#allocation8]
          %v377 = vld [vmem:[%s376] sm:$0xff]
          %v378 = vadd.f32 %v322, %v370
          %v379 = vadd.f32 %v377, %v378
          %380 = vst [vmem:[%s376] sm:$0xff] %v379
        $region44: #{tpu_custom_call.1} parent=27 // pred_fallthru
          _
        %p381 = scmp.gt.s32.totalorder %s326, 256
        // Predicated region
        $region45: #{tpu_custom_call.1} parent=27 // pred_check
          %p382 = pneg %p381
        $region46: #{tpu_custom_call.1} parent=27 // pred_check_branch
          %384 = sbr.rel (%p382) target = $region48
        $region47: #{tpu_custom_call.1} parent=27 // pred_region
          %v385 = vlaneseq
          %v386 = vshrl.u32 %v385, 7
          %v387 = vmul.u32 %v386, 128
          %v388 = vstv %s325
          %v389 = vadd.s32 %v388, %v387
          %v390 = vlaneseq
          %v391 = vand.u32 %v390, 127
          %v392 = vadd.s32 %v389, %v391
          %vm393 = vcmp.lt.s32.totalorder %v392, 256
          %v394 = vsel %vm393, %v319, 0.0
          %v395 = vsel %vm393, %v320, 0.0
          %v396 = vsel %vm393, %v321, 0.0
          %v397 = vsel %vm393, %v322, 0.0
          %vm398 = vcmp.eq.s32.totalorder %v323, 0
          %v399 = vsel %vm398, 1, 0
          %v400 = vcvt.s32.f32 %v399
          %v401 = vld [vmem:[%s268] sm:$0xff]
          %v402 = vsel %vm398, %v319, 0.0
          %v403 = vadd.f32 %v401, %v402
          %404 = vst [vmem:[%s268] sm:$0xff] %v403
          %v405 = vld [vmem:[%s275] sm:$0xff]
          %v406 = vadd.f32 %v394, %v400
          %v407 = vadd.f32 %v405, %v406
          %408 = vst [vmem:[%s275] sm:$0xff] %v407
          %vm409 = vcmp.eq.s32.totalorder %v323, 1
          %v410 = vsel %vm409, 1, 0
          %v411 = vcvt.s32.f32 %v410
          %s412 = scalar_lea.vmem %s268, 8 [#allocation7]
          %v413 = vld [vmem:[%s412] sm:$0xff]
          %v414 = vsel %vm409, %v320, 0.0
          %v415 = vadd.f32 %v413, %v414
          %416 = vst [vmem:[%s412] sm:$0xff] %v415
          %s417 = scalar_lea.vmem %s275, 8 [#allocation8]
          %v418 = vld [vmem:[%s417] sm:$0xff]
          %v419 = vadd.f32 %v395, %v411
          %v420 = vadd.f32 %v418, %v419
          %421 = vst [vmem:[%s417] sm:$0xff] %v420
          %vm422 = vcmp.eq.s32.totalorder %v323, 2
          %v423 = vsel %vm422, 1, 0
          %v424 = vcvt.s32.f32 %v423
          %s425 = scalar_lea.vmem %s268, 16 [#allocation7]
          %v426 = vld [vmem:[%s425] sm:$0xff]
          %v427 = vsel %vm422, %v321, 0.0
          %v428 = vadd.f32 %v426, %v427
          %429 = vst [vmem:[%s425] sm:$0xff] %v428
          %s430 = scalar_lea.vmem %s275, 16 [#allocation8]
          %v431 = vld [vmem:[%s430] sm:$0xff]
          %v432 = vadd.f32 %v396, %v424
          %v433 = vadd.f32 %v431, %v432
          %434 = vst [vmem:[%s430] sm:$0xff] %v433
          %vm435 = vcmp.eq.s32.totalorder %v323, 3
          %v436 = vsel %vm435, 1, 0
          %v437 = vcvt.s32.f32 %v436
          %s438 = scalar_lea.vmem %s268, 24 [#allocation7]
          %v439 = vld [vmem:[%s438] sm:$0xff]
          %v440 = vsel %vm435, %v322, 0.0
          %v441 = vadd.f32 %v439, %v440
          %442 = vst [vmem:[%s438] sm:$0xff] %v441
          %s443 = scalar_lea.vmem %s275, 24 [#allocation8]
          %v444 = vld [vmem:[%s443] sm:$0xff]
          %v445 = vadd.f32 %v397, %v437
          %v446 = vadd.f32 %v444, %v445
          %447 = vst [vmem:[%s443] sm:$0xff] %v446
        $region48: #{tpu_custom_call.1} parent=27 // pred_fallthru
          _
        %s448 = sand.u32 %s116, 1
        %s449 = scalar_lea.sflag [#allocation4], %s448
        %s450 = sand.u32 %s116, 1
        %s451 = smul.addr %s450, 32
        %s452 = scalar_lea.vmem [#allocation7], %s451
        %s453 = sand.u32 %s144, 1
        %s454 = scalar_lea.sflag [#allocation9], %s453
        %s455 = sand.u32 %s144, 1
        %s456 = smul.addr %s455, 32
        %s457 = scalar_lea.vmem [#allocation8], %s456
        // Predicated region
        $region49: #{tpu_custom_call.1} parent=27 // pred_check
          %p458 = pneg %p126
        $region50: #{tpu_custom_call.1} parent=27 // pred_check_branch
          %460 = sbr.rel (%p458) target = $region52
        $region51: #{tpu_custom_call.1} parent=27 // pred_region
          %462 = vsyncadd %s449, 0
          %s463 = smul.addr %s33, 4
          %s464 = smul.addr %s32, 4
          %s465 = sadd.s32 %s463, %s464
          %s466 = smul.addr %s465, 8
          %s467 = scalar_lea.hbm %s2, %s466
          %s468 = sshll.u32 %s452, 4
          %s469 = int_to_ptr.vmem [resolvable:$true] %s468
          %s470 = sshll.u32 %s467, 4
          %s471 = int_to_ptr.hbm [resolvable:$true] %s470
          %476 = dma.vmem_to_hbm [thread:$0]  %s469, 512, %s471, %s449, 128, 128, 8
        $region52: #{tpu_custom_call.1} parent=27 // pred_fallthru
          _
        // Predicated region
        $region53: #{tpu_custom_call.1} parent=27 // pred_check
          %p477 = pneg %p154
        $region54: #{tpu_custom_call.1} parent=27 // pred_check_branch
          %479 = sbr.rel (%p477) target = $region56
        $region55: #{tpu_custom_call.1} parent=27 // pred_region
          %481 = vsyncadd %s454, 0
          %s482 = smul.addr %s33, 4
          %s483 = smul.addr %s32, 4
          %s484 = sadd.s32 %s482, %s483
          %s485 = smul.addr %s484, 8
          %s486 = scalar_lea.hbm %s3, %s485
          %s487 = sshll.u32 %s457, 4
          %s488 = int_to_ptr.vmem [resolvable:$true] %s487
          %s489 = sshll.u32 %s486, 4
          %s490 = int_to_ptr.hbm [resolvable:$true] %s489
          %495 = dma.vmem_to_hbm [thread:$0]  %s488, 512, %s490, %s454, 128, 128, 8
        $region56: #{tpu_custom_call.1} parent=27 // pred_fallthru
          _
      $region28: #{tpu_custom_call.1} parent=5 // pred_fallthru
        _
      %p496 = scmp.le.s32.totalorder 2, %s22
      // Predicated region
      $region57: #{tpu_custom_call.1} parent=5 // pred_check
        %p497 = pneg %p496
      $region58: #{tpu_custom_call.1} parent=5 // pred_check_branch
        %499 = sbr.rel (%p497) target = $region60
      $region59: #{tpu_custom_call.1} parent=5 // pred_region
        %s500 = ssub.s32 %s22, 2
        // Predicated region
        $region61: #{tpu_custom_call.1} parent=59 // pred_check
          %p501 = pneg %p132
        $region62: #{tpu_custom_call.1} parent=59 // pred_check_branch
          %503 = sbr.rel (%p501) target = $region64
        $region63: #{tpu_custom_call.1} parent=59 // pred_region
          %s504 = sand.u32 %s117, 1
          %s505 = scalar_lea.sflag [#allocation4], %s504
          %s506 = sand.u32 %s117, 1
          %s507 = smul.addr %s506, 32
          %s508 = scalar_lea.vmem [#allocation7], %s507
          %510 = dma.done %s505, 512
        $region64: #{tpu_custom_call.1} parent=59 // pred_fallthru
          _
        // Predicated region
        $region65: #{tpu_custom_call.1} parent=59 // pred_check
          %p511 = pneg %p160
        $region66: #{tpu_custom_call.1} parent=59 // pred_check_branch
          %513 = sbr.rel (%p511) target = $region68
        $region67: #{tpu_custom_call.1} parent=59 // pred_region
          %s514 = sand.u32 %s145, 1
          %s515 = scalar_lea.sflag [#allocation9], %s514
          %s516 = sand.u32 %s145, 1
          %s517 = smul.addr %s516, 32
          %s518 = scalar_lea.vmem [#allocation8], %s517
          %520 = dma.done %s515, 512
        $region68: #{tpu_custom_call.1} parent=59 // pred_fallthru
          _
      $region60: #{tpu_custom_call.1} parent=5 // pred_fallthru
        _
    $region6: #{tpu_custom_call.1} parent=1 // loop_footer
      %s26 = sadd.s32 1, %s22
    $region7: #{tpu_custom_call.1} parent=1 // loop_footer_branch
      %21 = sbr.rel target = $region3
    $region8: #{tpu_custom_call.1} parent=1 // loop_exit
      _
    %521 = vsyncpa [#allocation3], 1
    %s522 = scalar_lea.sflag [#allocation3], 1
    %523 = vsyncpa %s522, 1
    %524 = vsyncpa [#allocation6], 1
    %s525 = scalar_lea.sflag [#allocation6], 1
    %526 = vsyncpa %s525, 1
    %527 = vsyncpa [#allocation4], 1
    %s528 = scalar_lea.sflag [#allocation4], 1
    %529 = vsyncpa %s528, 1
    %530 = vsyncpa [#allocation9], 1
    %s531 = scalar_lea.sflag [#allocation9], 1
    %532 = vsyncpa %s531, 1

</llo_original>
